<compile_context>
chip_gen: v5e
topology: v5e:2x2
jax: 0.10.0
libtpu: 0.0.40
codegen_flags: <defaults>
</compile_context>

<pallas_src>
import jax
import jax.numpy as jnp
from jax.experimental import pallas as pl
from jax.experimental.pallas import tpu as pltpu


def _add_pe_kernel(x_ref, pe_ref, o_ref):
    # Elementwise add; the pe block has either a squeezed batch dim (Path 1:
    # (ts, D) vs x (tb, ts, D)) or a size-1 leading row (Path 2: (1, tl) vs
    # (tb, tl)) and broadcasts over the batch rows of the x block.
    o_ref[...] = (x_ref[...] + pe_ref[...]).astype(o_ref.dtype)


def _sublane_multiple(itemsize: int) -> int:
    # (8, 128) vreg tile for 32-bit types; sub-32-bit dtypes pack along sublanes.
    return 8 * max(1, 4 // itemsize)  # f32 -> 8, bf16 -> 16, int8 -> 32


def _generation_defaults():
    """(target_tile_bytes, vmem_limit_bytes), tuned per TPU generation."""
    tile, limit = 4 * 1024 * 1024, 32 * 1024 * 1024   # v5e / v6e defaults
    try:
        info = pltpu.get_tpu_info()
        vmem = getattr(info, "vmem_capacity_bytes", None)
        if vmem is not None and vmem <= 80 * 1024 * 1024:
            # v7x: 64 MiB VMEM/TC but ~3.2 TB/s HBM -> bigger tiles amortize the
            # ~0.35 us per-grid-step overhead; ~36 MiB live fits under 44 MiB.
            tile, limit = 6 * 1024 * 1024, 44 * 1024 * 1024
    except Exception:
        pass  # not on TPU / info unavailable: keep conservative defaults
    return tile, limit


def learnable_temporal_encoding(x, pe, *, target_tile_bytes=None,
                                vmem_limit_bytes=None,
                                min_pallas_bytes=1 << 20):
    """x: (B, S, D), pe: (1, max_len, D).  Returns x + pe[:, :S, :]."""
    B, S, D = x.shape
    _, max_len, d_pe = pe.shape
    assert d_pe == D and S <= max_len

    # Match torch's dtype-promoting `x + pe` (bf16 x + f32 pe -> f32 out).
    out_dtype = jnp.promote_types(x.dtype, pe.dtype)
    x_item = jnp.dtype(x.dtype).itemsize
    pe_item = jnp.dtype(pe.dtype).itemsize
    out_item = jnp.dtype(out_dtype).itemsize
    itemsize = max(x_item, out_item)                       # per-element tile cost
    sub = _sublane_multiple(min(x_item, pe_item, out_item))

    tile_default, vmem_default = _generation_defaults()
    if target_tile_bytes is None:
        target_tile_bytes = tile_default
    if vmem_limit_bytes is None:
        vmem_limit_bytes = vmem_default

    compiler_params = pltpu.CompilerParams(
        dimension_semantics=("parallel", "parallel"),
        vmem_limit_bytes=vmem_limit_bytes,
    )
    cost = pl.CostEstimate(
        flops=B * S * D,
        transcendentals=0,
        bytes_accessed=B * S * D * (x_item + out_item) + S * D * pe_item,
    )

    if D % 128 == 0 and S >= sub:
        # ---- Path 1: lane dim already dense; tile seq (sublane) AND batch. ----
        rows_fit = max(sub, (target_tile_bytes // (D * itemsize)) // sub * sub)
        ts = min(rows_fit, (S // sub) * sub)
        # Pack several batch items per block so each step still moves
        # ~target_tile_bytes even when ts already covers all of S.
        tb = max(1, min(B, target_tile_bytes // (ts * D * itemsize)))
        seq_tiles, batch_tiles = pl.cdiv(S, ts), pl.cdiv(B, tb)
        # Megacore (v7x: 2 TCs): make sure the parallel grid has >= 2 blocks.
        if seq_tiles * batch_tiles < 2:
            if B >= 2:
                tb = (B + 1) // 2          # free: pe block index is unchanged
                batch_tiles = pl.cdiv(B, tb)
            elif S >= 2 * sub:
                ts = max(sub, ((ts // 2) // sub) * sub)  # costs one extra pe fetch
                seq_tiles = pl.cdiv(S, ts)
        # INVARIANT: grid = (seq_tiles, batch_tiles), batch innermost; pe's
        # index_map ignores b, so its tile is DMA'd once per seq tile.  Do not
        # reorder these axes or the pe re-DMA skip (and the ~2x B*S*D traffic
        # floor) is lost.
        grid = (seq_tiles, batch_tiles)
        return pl.pallas_call(
            _add_pe_kernel,
            out_shape=jax.ShapeDtypeStruct((B, S, D), out_dtype),
            grid=grid,
            in_specs=[
                pl.BlockSpec((tb, ts, D), lambda s, b: (b, s, 0)),
                # pe passed whole; first-S rows selected purely via index_map;
                # squeezed leading dim -> (ts, D) broadcasts over the tb rows.
                pl.BlockSpec((None, ts, D), lambda s, b: (0, s, 0)),
            ],
            out_specs=pl.BlockSpec((tb, ts, D), lambda s, b: (b, s, 0)),
            compiler_params=compiler_params,
            cost_estimate=cost,
        )(x, pe)

    # ---- Path 2: D < 128 (or ragged) -> fold (S, D) into a dense lane axis. ----
    if B * S * D * itemsize < min_pallas_bytes:
        # Sub-MiB lane-folded workloads: XLA's fused broadcast-add is already at
        # roofline and the pallas_call fixed overhead would dominate.
        return x + pe[:, :S, :]

    L = S * D
    x2 = x.reshape(B, L)                 # contiguous -> free reshape
    pe2 = pe.reshape(1, max_len * D)     # flat first S*D entries == pe[:, :S, :]

    tb = B if B <= 256 else 256          # full dim (always legal) or 8-aligned tile
    lanes_fit = max(128, (target_tile_bytes // (tb * itemsize)) // 128 * 128)
    tl = L if lanes_fit >= L else lanes_fit
    lane_tiles, batch_tiles = pl.cdiv(L, tl), pl.cdiv(B, tb)
    # Megacore: split the lane axis if only one block would exist.
    if lane_tiles * batch_tiles < 2 and L >= 2 * 128:
        tl = max(128, ((tl // 2) // 128) * 128)
        lane_tiles = pl.cdiv(L, tl)
    if tl == L and L % 128 != 0:
        # A full-extent lane block must equal pe's own lane dim to be legal.
        pe2 = pe2[:, :L]
    # INVARIANT: grid = (lane_tiles, batch_tiles), batch innermost; pe's
    # index_map ignores b -> pe tile re-DMA skipped across the inner loop.
    grid = (lane_tiles, batch_tiles)
    out2 = pl.pallas_call(
        _add_pe_kernel,
        out_shape=jax.ShapeDtypeStruct((B, L), out_dtype),
        grid=grid,
        in_specs=[
            pl.BlockSpec((tb, tl), lambda l, b: (b, l)),
            pl.BlockSpec((1, tl), lambda l, b: (0, l)),  # broadcast over batch rows
        ],
        out_specs=pl.BlockSpec((tb, tl), lambda l, b: (b, l)),
        compiler_params=compiler_params,
        cost_estimate=cost,
    )(x2, pe2)
    return out2.reshape(B, S, D)


if __name__ == "__main__":
    key = jax.random.PRNGKey(0)
    k1, k2, k3, k4, k5, k6 = jax.random.split(key, 6)

    # Test 1: module-consistent tiny shapes (d_model=32 < 128) -> XLA fallback
    # for sub-MiB lane-folded workloads (per perf review).
    B, S, D, MAX_LEN = 2, 8, 32, 64
    x = jax.random.normal(k1, (B, S, D), dtype=jnp.float32)
    pe = jax.random.normal(k2, (1, MAX_LEN, D), dtype=jnp.float32)
    out = jax.block_until_ready(learnable_temporal_encoding(x, pe))
    ref = x + pe[:, :S, :]
    assert out.shape == (B, S, D)
    assert jnp.allclose(out, ref, atol=1e-6), "mismatch (tiny fallback path)"

    # Test 2: lane-dense d_model (multiple of 128) -> batch+seq tiled Pallas path.
    B2, S2, D2, MAX_LEN2 = 2, 16, 128, 32
    x2 = jax.random.normal(k3, (B2, S2, D2), dtype=jnp.float32)
    pe2 = jax.random.normal(k4, (1, MAX_LEN2, D2), dtype=jnp.float32)
    out2 = jax.block_until_ready(learnable_temporal_encoding(x2, pe2))
    ref2 = x2 + pe2[:, :S2, :]
    assert out2.shape == (B2, S2, D2)
    assert jnp.allclose(out2, ref2, atol=1e-6), "mismatch (seq+batch tiled path)"

    # Test 3: lane-folded Pallas path (force past the tiny-input XLA fallback).
    B3, S3, D3, MAX_LEN3 = 8, 64, 32, 128
    x3 = jax.random.normal(k5, (B3, S3, D3), dtype=jnp.float32)
    pe3 = jax.random.normal(k6, (1, MAX_LEN3, D3), dtype=jnp.float32)
    out3 = jax.block_until_ready(
        learnable_temporal_encoding(x3, pe3, min_pallas_bytes=0))
    ref3 = x3 + pe3[:, :S3, :]
    assert out3.shape == (B3, S3, D3)
    assert jnp.allclose(out3, ref3, atol=1e-6), "mismatch (lane-folded path)"

    print("KERNEL_OK")
</pallas_src>

<mosaic_0001>
module attributes {stable_mosaic.version = 11 : i64} {
  func.func @_add_pe_kernel(%arg0: i32, %arg1: i32, %arg2: memref<1x16x128xf32, #tpu.memory_space<vmem>>, %arg3: memref<1x16x128xf32, #tpu.memory_space<vmem>>, %arg4: memref<1x16x128xf32, #tpu.memory_space<vmem>>) attributes {dimension_semantics = [#tpu.dimension_semantics<parallel>, #tpu.dimension_semantics<parallel>], iteration_bounds = array<i64: 1, 2>, scalar_prefetch = 0 : i64, scratch_operands = 0 : i64, tpu.core_type = #tpu.core_type<tc>, window_params = [{transform_indices = @transform_0, window_bounds = array<i64: 1, 16, 128>}, {transform_indices = @transform_1, window_bounds = array<i64: 1, 16, 128>}, {transform_indices = @transform_2, window_bounds = array<i64: 1, 16, 128>}]} {
    %c0 = arith.constant 0 : index
    %c0_0 = arith.constant 0 : index
    %c0_1 = arith.constant 0 : index
    %0 = vector.load %arg2[%c0, %c0_0, %c0_1] : memref<1x16x128xf32, #tpu.memory_space<vmem>>, vector<1x16x128xf32>
    %c0_2 = arith.constant 0 : index
    %c0_3 = arith.constant 0 : index
    %c0_4 = arith.constant 0 : index
    %1 = vector.load %arg3[%c0_2, %c0_3, %c0_4] : memref<1x16x128xf32, #tpu.memory_space<vmem>>, vector<1x16x128xf32>
    %2 = vector.shape_cast %1 : vector<1x16x128xf32> to vector<16x128xf32>
    %3 = vector.shape_cast %2 : vector<16x128xf32> to vector<1x16x128xf32>
    %4 = arith.addf %0, %3 : vector<1x16x128xf32>
    %c0_5 = arith.constant 0 : index
    %c0_6 = arith.constant 0 : index
    %c0_7 = arith.constant 0 : index
    %5 = vector.load %arg4[%c0_5, %c0_6, %c0_7] : memref<1x16x128xf32, #tpu.memory_space<vmem>>, vector<1x16x128xf32>
    tpu.vector_store %arg4[%c0_5, %c0_6, %c0_7], %4 {strides = array<i32>} : memref<1x16x128xf32, #tpu.memory_space<vmem>>, vector<1x16x128xf32>,
    return
  }
  func.func @transform_0(%arg0: i32, %arg1: i32) -> (i32, i32, i32) {
    %c0_i32 = arith.constant 0 : i32
    %c0_i32_0 = arith.constant 0 : i32
    return %arg1, %arg0, %c0_i32 : i32, i32, i32
  }
  func.func @transform_1(%arg0: i32, %arg1: i32) -> (i32, i32, i32) {
    %c0_i32 = arith.constant 0 : i32
    %c0_i32_0 = arith.constant 0 : i32
    %c0_i32_1 = arith.constant 0 : i32
    return %c0_i32, %arg0, %c0_i32_0 : i32, i32, i32
  }
  func.func @transform_2(%arg0: i32, %arg1: i32) -> (i32, i32, i32) {
    %c0_i32 = arith.constant 0 : i32
    %c0_i32_0 = arith.constant 0 : i32
    return %arg1, %arg0, %c0_i32 : i32, i32, i32
  }
}

</mosaic_0001>

<llo_original>
// kernel: tpu_custom_call.1
$region0: #{tpu_custom_call.1}
  #allocation0 [shape = 'u32[]', space=smem, size = 0x4, offset = 0x4, fixed_abs, tag = 'smem constant byte address 0x4 - core index']
  #allocation1 [shape = 'u32[72,128]{1,0:T(1,128)}', space=vmem, size = 0x9000, scoped, tag = 'internal scratch']
  %s0 = inlined_call_operand.hbm [shape: f32[2,16,128], index: 0, kind: input, shape index: {}]
  %s1 = inlined_call_operand.hbm [shape: f32[1,32,128], index: 1, kind: input, shape index: {}]
  %s2 = inlined_call_operand.hbm [shape: f32[2,16,128], index: 2, kind: output, shape index: {}]
  %s3 = sld [smem:[#allocation0]]
  $region49: #{tpu_custom_call.1} parent=0
    _
  %s5 = ssub.s32 1, %s3
  %s6 = scalar_select 0, %s5, %s3
  $region1: #{tpu_custom_call.1} parent=0
    #allocation2 [shape = 'u8[16384]{0}', space=vmem, size = 0x4000, scoped, tag = 'input window, operand 0']
    #allocation3 [shape = 's32[2]{0}', space=sflag, size = 0x8, scoped, tag = 'scoped memory for tpu_custom_call.1']
    #allocation4 [shape = 's32[2]{0}', space=sflag, size = 0x8, scoped, tag = 'scoped memory for tpu_custom_call.1']
    #allocation5 [shape = 'u8[8192]{0}', space=vmem, size = 0x2000, scoped, tag = 'input window, operand 1, single buffered']
    #allocation6 [shape = 's32[1]{0}', space=sflag, size = 0x4, scoped, tag = 'scoped memory for tpu_custom_call.1']
    #allocation7 [shape = 'u8[16384]{0}', space=vmem, size = 0x4000, scoped, tag = 'output window, operand 0']
    %7 = vsyncpa [#allocation3], 0
    %s8 = scalar_lea.sflag [#allocation3], 1
    %9 = vsyncpa %s8, 0
    %10 = vsyncpa [#allocation6], 0
    %11 = vsyncpa [#allocation4], 0
    %s12 = scalar_lea.sflag [#allocation4], 1
    %13 = vsyncpa %s12, 0
    loop: start=0, step=1, limit=4
    $region2: #{tpu_custom_call.1} parent=1 // loop_pre_header
      _
    $region3: #{tpu_custom_call.1} parent=1 // loop_header
      %s15 = sphi 0, %s19
      %p16 = scmp.ge.s32.totalorder %s15, 4
      %s22 = sphi 0, %s34
      %s23 = sphi 0, %s30
      %s24 = sphi 0, %s22
      %s25 = sphi 0, %s23
      %s26 = sphi 0, %s24
      %s27 = sphi 0, %s25
      %s39 = sphi 0, %s41
      %s42 = sphi 0, %s39
      %s43 = sphi 0, %s42
      %s59 = sphi 0, %s43
      %s65 = sphi 0, %s67
      %s68 = sphi 0, %s65
      %s69 = sphi 0, %s68
      %s85 = sphi 0, %s69
      %s93 = sphi 0, %s95
      %s96 = sphi 0, %s93
      %s97 = sphi 0, %s96
      %s113 = sphi 0, %s97
    $region4: #{tpu_custom_call.1} parent=1 // loop_header_branch
      %18 = sbr.rel (%p16) target = $region8
    $region5: #{tpu_custom_call.1} parent=1 // loop_body
      %s20 = ssub.s32 %s15, 1
      %s21 = ssub.s32 %s15, 2
      %s28 = sadd.s32 1, %s23
      %p29 = scmp.ge.s32.totalorder %s28, 2
      %s30 = scalar_select %p29, 0, %s28
      %s31 = sadd.s32 1, %s22
      %s32 = scalar_select %p29, %s31, %s22
      %p33 = scmp.ge.s32.totalorder %s32, 1
      %s34 = scalar_select %p33, 0, %s32
      %s35 = ssub.s32 %s23, %s30
      %s36 = ssub.s32 %s22, %s34
      %s37 = sor.u32 %s35, %s36
      %p38 = scmp.eq.s32.totalorder %s37, 0
      %s40 = sadd.s32 %s39, 1
      %s41 = scalar_select %p38, %s39, %s40
      %p44 = pneg %p38
      %p45 = scmp.eq.s32.totalorder %s15, 1
      %p46 = por %p44, %p45
      %p47 = scmp.ne.s32.totalorder %s39, %s42
      %p48 = scmp.eq.s32.totalorder %s15, 0
      %p49 = por %p47, %p48
      %p50 = scmp.ne.s32.totalorder %s39, %s42
      %p51 = scmp.eq.s32.totalorder %s20, 1
      %p52 = por %p50, %p51
      %p53 = scmp.ne.s32.totalorder %s42, %s43
      %p54 = scmp.eq.s32.totalorder %s20, 0
      %p55 = por %p53, %p54
      %p56 = scmp.ne.s32.totalorder %s42, %s43
      %p57 = scmp.eq.s32.totalorder %s21, 1
      %p58 = por %p56, %p57
      %p60 = scmp.ne.s32.totalorder %s43, %s59
      %p61 = scmp.eq.s32.totalorder %s21, 0
      %p62 = por %p60, %p61
      %s63 = ssub.s32 %s22, %s34
      %p64 = scmp.eq.s32.totalorder %s63, 0
      %s66 = sadd.s32 %s65, 1
      %s67 = scalar_select %p64, %s65, %s66
      %p70 = pneg %p64
      %p71 = scmp.eq.s32.totalorder %s15, 1
      %p72 = por %p70, %p71
      %p73 = scmp.ne.s32.totalorder %s65, %s68
      %p74 = scmp.eq.s32.totalorder %s15, 0
      %p75 = por %p73, %p74
      %p76 = scmp.ne.s32.totalorder %s65, %s68
      %p77 = scmp.eq.s32.totalorder %s20, 1
      %p78 = por %p76, %p77
      %p79 = scmp.ne.s32.totalorder %s68, %s69
      %p80 = scmp.eq.s32.totalorder %s20, 0
      %p81 = por %p79, %p80
      %p82 = scmp.ne.s32.totalorder %s68, %s69
      %p83 = scmp.eq.s32.totalorder %s21, 1
      %p84 = por %p82, %p83
      %p86 = scmp.ne.s32.totalorder %s69, %s85
      %p87 = scmp.eq.s32.totalorder %s21, 0
      %p88 = por %p86, %p87
      %s89 = ssub.s32 %s23, %s30
      %s90 = ssub.s32 %s22, %s34
      %s91 = sor.u32 %s89, %s90
      %p92 = scmp.eq.s32.totalorder %s91, 0
      %s94 = sadd.s32 %s93, 1
      %s95 = scalar_select %p92, %s93, %s94
      %p98 = pneg %p92
      %p99 = scmp.eq.s32.totalorder %s15, 1
      %p100 = por %p98, %p99
      %p101 = scmp.ne.s32.totalorder %s93, %s96
      %p102 = scmp.eq.s32.totalorder %s15, 0
      %p103 = por %p101, %p102
      %p104 = scmp.ne.s32.totalorder %s93, %s96
      %p105 = scmp.eq.s32.totalorder %s20, 1
      %p106 = por %p104, %p105
      %p107 = scmp.ne.s32.totalorder %s96, %s97
      %p108 = scmp.eq.s32.totalorder %s20, 0
      %p109 = por %p107, %p108
      %p110 = scmp.ne.s32.totalorder %s96, %s97
      %p111 = scmp.eq.s32.totalorder %s21, 1
      %p112 = por %p110, %p111
      %p114 = scmp.ne.s32.totalorder %s97, %s113
      %p115 = scmp.eq.s32.totalorder %s21, 0
      %p116 = por %p114, %p115
      %p117 = scmp.le.s32.totalorder 1, %s15
      %p118 = scmp.lt.s32.totalorder %s15, 3
      %p119 = pnand %p117, %p118
      %p120 = pneg %p119
      // Predicated region
      $region9: #{tpu_custom_call.1} parent=5 // pred_check
        _
      $region10: #{tpu_custom_call.1} parent=5 // pred_check_branch
        %122 = sbr.rel (%p119) target = $region12
      $region11: #{tpu_custom_call.1} parent=5 // pred_region
        %s123 = ssub.s32 %s15, 1
        // Predicated region
        $region13: #{tpu_custom_call.1} parent=11 // pred_check
          %p124 = pneg %p81
        $region14: #{tpu_custom_call.1} parent=11 // pred_check_branch
          %126 = sbr.rel (%p124) target = $region16
        $region15: #{tpu_custom_call.1} parent=11 // pred_region
          %s127 = smul.u32 2, %s24
          %129 = vsyncadd [#allocation6], 0
          %s130 = smul.addr %s127, 8
          %s131 = scalar_lea.hbm %s1, %s130
          %s132 = sshll.u32 %s131, 4
          %s133 = int_to_ptr.hbm [resolvable:$true] %s132
          %s134 = sshll.u32 [#allocation5], 4
          %s135 = int_to_ptr.vmem [resolvable:$true] %s134
          %140 = dma.hbm_to_vmem [thread:$0]  %s133, 256, %s135, [#allocation6], 128, 128, 8
        $region16: #{tpu_custom_call.1} parent=11 // pred_fallthru
          _
      $region12: #{tpu_custom_call.1} parent=5 // pred_fallthru
        _
      %p141 = scmp.lt.s32.totalorder %s15, 2
      // Predicated region
      $region17: #{tpu_custom_call.1} parent=5 // pred_check
        %p142 = pneg %p141
      $region18: #{tpu_custom_call.1} parent=5 // pred_check_branch
        %144 = sbr.rel (%p142) target = $region20
      $region19: #{tpu_custom_call.1} parent=5 // pred_region
        // Predicated region
        $region21: #{tpu_custom_call.1} parent=19 // pred_check
          %p145 = pneg %p49
        $region22: #{tpu_custom_call.1} parent=19 // pred_check_branch
          %147 = sbr.rel (%p145) target = $region24
        $region23: #{tpu_custom_call.1} parent=19 // pred_region
          %s148 = sand.u32 %s39, 1
          %s149 = scalar_lea.sflag [#allocation3], %s148
          %s150 = sand.u32 %s39, 1
          %s151 = smul.addr %s150, 16
          %s152 = scalar_lea.vmem [#allocation2], %s151
          %s153 = smul.u32 2, %s22
          %155 = vsyncadd %s149, 0
          %s156 = smul.addr %s23, 2
          %s157 = sadd.s32 %s153, %s156
          %s158 = smul.addr %s157, 8
          %s159 = scalar_lea.hbm %s0, %s158
          %s160 = sshll.u32 %s159, 4
          %s161 = int_to_ptr.hbm [resolvable:$true] %s160
          %s162 = sshll.u32 %s152, 4
          %s163 = int_to_ptr.vmem [resolvable:$true] %s162
          %168 = dma.hbm_to_vmem [thread:$0]  %s161, 256, %s163, %s149, 128, 128, 8
        $region24: #{tpu_custom_call.1} parent=19 // pred_fallthru
          _
      $region20: #{tpu_custom_call.1} parent=5 // pred_fallthru
        _
      %p169 = scmp.le.s32.totalorder 1, %s15
      %p170 = scmp.lt.s32.totalorder %s15, 3
      %p171 = pnand %p169, %p170
      %p172 = pneg %p171
      // Predicated region
      $region25: #{tpu_custom_call.1} parent=5 // pred_check
        _
      $region26: #{tpu_custom_call.1} parent=5 // pred_check_branch
        %174 = sbr.rel (%p171) target = $region28
      $region27: #{tpu_custom_call.1} parent=5 // pred_region
        %s175 = ssub.s32 %s15, 1
        %s176 = sand.u32 %s42, 1
        %s177 = scalar_lea.sflag [#allocation3], %s176
        %s178 = sand.u32 %s42, 1
        %s179 = smul.addr %s178, 16
        %s180 = scalar_lea.vmem [#allocation2], %s179
        // Predicated region
        $region29: #{tpu_custom_call.1} parent=27 // pred_check
          %p181 = pneg %p55
        $region30: #{tpu_custom_call.1} parent=27 // pred_check_branch
          %183 = sbr.rel (%p181) target = $region32
        $region31: #{tpu_custom_call.1} parent=27 // pred_region
          %185 = dma.done %s177, 256
        $region32: #{tpu_custom_call.1} parent=27 // pred_fallthru
          _
        // Predicated region
        $region33: #{tpu_custom_call.1} parent=27 // pred_check
          %p186 = pneg %p81
        $region34: #{tpu_custom_call.1} parent=27 // pred_check_branch
          %188 = sbr.rel (%p186) target = $region36
        $region35: #{tpu_custom_call.1} parent=27 // pred_region
          %190 = dma.done [#allocation6], 256
        $region36: #{tpu_custom_call.1} parent=27 // pred_fallthru
          _
        %s191 = sand.u32 %s42, 1
        %s192 = scalar_lea.sflag [#allocation3], %s191
        %s193 = sand.u32 %s42, 1
        %s194 = smul.addr %s193, 16
        %s195 = scalar_lea.vmem [#allocation2], %s194
        %p196 = pneg %p55
        %p197 = pneg %p52
        %p198 = pneg %p81
        %p199 = pneg %p78
        %p200 = pneg %p109
        %p201 = pneg %p106
        %s202 = sand.u32 %s96, 1
        %s203 = scalar_lea.sflag [#allocation4], %s202
        %s204 = sand.u32 %s96, 1
        %s205 = smul.addr %s204, 16
        %s206 = scalar_lea.vmem [#allocation7], %s205
        %s207 = smul.u32 2, %s24
        %s208 = smul.u32 2, %s24
        %s209 = smul.u32 2, %s24
        %v210 = vld [vmem:[%s180] sm:$0xff]
        %v211 = vld [vmem:[%s180 + $0x8] sm:$0xff]
        %v212 = vld [vmem:[#allocation5] sm:$0xff]
        %v213 = vld [vmem:[#allocation5 + $0x8] sm:$0xff]
        %v214 = vadd.f32 %v210, %v212
        %v215 = vadd.f32 %v211, %v213
        %216 = vst [vmem:[%s206] sm:$0xff] %v214
        %217 = vst [vmem:[%s206 + $0x8] sm:$0xff] %v215
        %s218 = sand.u32 %s96, 1
        %s219 = scalar_lea.sflag [#allocation4], %s218
        %s220 = sand.u32 %s96, 1
        %s221 = smul.addr %s220, 16
        %s222 = scalar_lea.vmem [#allocation7], %s221
        // Predicated region
        $region37: #{tpu_custom_call.1} parent=27 // pred_check
          %p223 = pneg %p106
        $region38: #{tpu_custom_call.1} parent=27 // pred_check_branch
          %225 = sbr.rel (%p223) target = $region40
        $region39: #{tpu_custom_call.1} parent=27 // pred_region
          %s226 = smul.u32 2, %s24
          %228 = vsyncadd %s219, 0
          %s229 = smul.addr %s25, 2
          %s230 = sadd.s32 %s226, %s229
          %s231 = smul.addr %s230, 8
          %s232 = scalar_lea.hbm %s2, %s231
          %s233 = sshll.u32 %s222, 4
          %s234 = int_to_ptr.vmem [resolvable:$true] %s233
          %s235 = sshll.u32 %s232, 4
          %s236 = int_to_ptr.hbm [resolvable:$true] %s235
          %241 = dma.vmem_to_hbm [thread:$0]  %s234, 256, %s236, %s219, 128, 128, 8
        $region40: #{tpu_custom_call.1} parent=27 // pred_fallthru
          _
      $region28: #{tpu_custom_call.1} parent=5 // pred_fallthru
        _
      %p242 = scmp.le.s32.totalorder 2, %s15
      // Predicated region
      $region41: #{tpu_custom_call.1} parent=5 // pred_check
        %p243 = pneg %p242
      $region42: #{tpu_custom_call.1} parent=5 // pred_check_branch
        %245 = sbr.rel (%p243) target = $region44
      $region43: #{tpu_custom_call.1} parent=5 // pred_region
        %s246 = ssub.s32 %s15, 2
        // Predicated region
        $region45: #{tpu_custom_call.1} parent=43 // pred_check
          %p247 = pneg %p112
        $region46: #{tpu_custom_call.1} parent=43 // pred_check_branch
          %249 = sbr.rel (%p247) target = $region48
        $region47: #{tpu_custom_call.1} parent=43 // pred_region
          %s250 = sand.u32 %s97, 1
          %s251 = scalar_lea.sflag [#allocation4], %s250
          %s252 = sand.u32 %s97, 1
          %s253 = smul.addr %s252, 16
          %s254 = scalar_lea.vmem [#allocation7], %s253
          %256 = dma.done %s251, 256
        $region48: #{tpu_custom_call.1} parent=43 // pred_fallthru
          _
      $region44: #{tpu_custom_call.1} parent=5 // pred_fallthru
        _
    $region6: #{tpu_custom_call.1} parent=1 // loop_footer
      %s19 = sadd.s32 1, %s15
    $region7: #{tpu_custom_call.1} parent=1 // loop_footer_branch
      %14 = sbr.rel target = $region3
    $region8: #{tpu_custom_call.1} parent=1 // loop_exit
      _
    %257 = vsyncpa [#allocation3], 1
    %s258 = scalar_lea.sflag [#allocation3], 1
    %259 = vsyncpa %s258, 1
    %260 = vsyncpa [#allocation6], 1
    %261 = vsyncpa [#allocation4], 1
    %s262 = scalar_lea.sflag [#allocation4], 1
    %263 = vsyncpa %s262, 1

</llo_original>
